<compile_context>
chip_gen: v5e
topology: v5e:2x2
jax: 0.10.0
libtpu: 0.0.40
codegen_flags: <defaults>
</compile_context>

<pallas_src>
import functools

import jax
import jax.numpy as jnp
import numpy as np
from jax.experimental import pallas as pl
from jax.experimental.pallas import tpu as pltpu


# ------------------------------ helpers ------------------------------------ #
def _round_up(v, m):
    return (v + m - 1) // m * m


def _pick_tile(total, desired):
    """Largest multiple of 128 <= desired that divides total (total % 128 == 0)."""
    t = max(min(desired, total) // 128 * 128, 128)
    while total % t:
        t -= 128
    return t


def _vmem_limit_bytes():
    cap = 64 * 1024 * 1024                      # conservative default (v7x/TC)
    try:
        cap = int(pltpu.get_tpu_info().vmem_capacity_bytes)
    except Exception:
        pass                                    # keep conservative fallback
    # leave headroom: ~48 MiB on 64 MiB parts, ~96-100 MiB on 128 MiB parts
    return int(min(cap * 3 // 4, 100 * 1024 * 1024))


# --------------------------- XW precompute kernel --------------------------- #
def _xw_kernel(x_ref, w_ref, o_ref):
    # x_ref: (TN, F_in_p)   w_ref: (1, F_in_p, F_out_p)   o_ref: (1, TN, F_out_p)
    o_ref[0] = jnp.dot(x_ref[...], w_ref[0],
                       preferred_element_type=jnp.float32).astype(o_ref.dtype)


def precompute_xw(x, w, *, vmem_limit, tile_n=512):
    """Hoisted slab: out[r] = x @ w[r], computed once per layer."""
    n_p, f_in_p = x.shape
    num_rel, _, f_out_p = w.shape
    tn = _pick_tile(n_p, tile_n)
    return pl.pallas_call(
        _xw_kernel,
        out_shape=jax.ShapeDtypeStruct((num_rel, n_p, f_out_p), x.dtype),
        grid_spec=pltpu.PrefetchScalarGridSpec(
            num_scalar_prefetch=0,
            grid=(num_rel, n_p // tn),
            in_specs=[
                pl.BlockSpec((tn, f_in_p), lambda r, i: (i, 0)),
                pl.BlockSpec((1, f_in_p, f_out_p), lambda r, i: (r, 0, 0)),
            ],
            out_specs=pl.BlockSpec((1, tn, f_out_p), lambda r, i: (r, i, 0)),
        ),
        compiler_params=pltpu.CompilerParams(
            dimension_semantics=("parallel", "parallel"),
            vmem_limit_bytes=vmem_limit,
        ),
    )(x, w)


# ---------------------------- main layer kernel ----------------------------- #
def _rgcn_layer_kernel(a_ref, xw_ref, b_ref, o_ref, acc_ref, *, num_rel,
                       apply_relu):
    """o = sum_r act( A_r @ XW_r + b_r ), K-tiled over source nodes.

    a_ref  : (R, TM, TK)       normalized adjacency tile (MXU dtype)
    xw_ref : (R, TK, F_out_p)  hoisted X@W_r tile       (MXU dtype)
    b_ref  : (R, 1, F_out_p)   per-relation bias (f32)
    o_ref  : (TM, F_out_p)     output tile (f32)
    acc_ref: (R, TM, F_out_p)  f32 per-relation accumulators
    """
    k = pl.program_id(1)

    @pl.when(k == 0)
    def _():
        acc_ref[...] = jnp.zeros_like(acc_ref)

    # R is small & static: unrolled MXU matmuls, one f32 accumulator per rel.
    for r in range(num_rel):
        acc_ref[r] += jnp.dot(a_ref[r], xw_ref[r],
                              preferred_element_type=jnp.float32)

    @pl.when(k == pl.num_programs(1) - 1)
    def _():
        out = jnp.zeros(o_ref.shape, jnp.float32)
        for r in range(num_rel):
            h_r = acc_ref[r] + b_ref[r]          # bias, then activation (DGL)
            if apply_relu:
                h_r = jnp.maximum(h_r, 0.0)      # per-relation ReLU
            out = out + h_r                      # hetero aggregate='sum'
        o_ref[...] = out.astype(o_ref.dtype)


def rgcn_layer(a_pad, xw, b, *, apply_relu, tile_m, tile_k, vmem_limit):
    num_rel, n_p, _ = a_pad.shape
    f_out_p = xw.shape[2]
    in_size = jnp.dtype(a_pad.dtype).itemsize

    tm = _pick_tile(n_p, tile_m)
    tk = _pick_tile(n_p, tile_k)

    def est(tm_, tk_):                           # VMEM budget estimate
        return (2 * num_rel * tm_ * tk_ * in_size        # adjacency (dbl buf)
                + 2 * num_rel * tk_ * f_out_p * in_size  # XW tiles (dbl buf)
                + 2 * tm_ * f_out_p * 4                  # output (dbl buf)
                + num_rel * tm_ * f_out_p * 4            # f32 accumulators
                + 2 * num_rel * f_out_p * 4)             # bias
    while est(tm, tk) > vmem_limit * 8 // 10 and tk > 128:
        tk = _pick_tile(n_p, tk - 128)
    while est(tm, tk) > vmem_limit * 8 // 10 and tm > 128:
        tm = _pick_tile(n_p, tm - 128)

    kernel = functools.partial(_rgcn_layer_kernel, num_rel=num_rel,
                               apply_relu=apply_relu)
    return pl.pallas_call(
        kernel,
        out_shape=jax.ShapeDtypeStruct((n_p, f_out_p), jnp.float32),
        grid_spec=pltpu.PrefetchScalarGridSpec(
            num_scalar_prefetch=0,
            grid=(n_p // tm, n_p // tk),                 # (dst tiles, src tiles)
            in_specs=[
                pl.BlockSpec((num_rel, tm, tk), lambda i, k: (0, i, k)),
                pl.BlockSpec((num_rel, tk, f_out_p), lambda i, k: (0, k, 0)),
                pl.BlockSpec((num_rel, 1, f_out_p), lambda i, k: (0, 0, 0)),
            ],
            out_specs=pl.BlockSpec((tm, f_out_p), lambda i, k: (i, 0)),
            scratch_shapes=[pltpu.VMEM((num_rel, tm, f_out_p), jnp.float32)],
        ),
        compiler_params=pltpu.CompilerParams(
            # dst axis megacore-shardable (v7x); reduction axis last, arbitrary
            dimension_semantics=("parallel", "arbitrary"),
            vmem_limit_bytes=vmem_limit,
        ),
    )(a_pad, xw, b)


# ------------------------------ JAX glue ------------------------------------ #
def normalize_adjacency(adj):
    """DGL GraphConv norm='both': A_hat = D_dst^{-1/2} A D_src^{-1/2}; degrees
    clamped to >= 1 (matches DGL's clamp for zero-degree nodes)."""
    out_deg = jnp.clip(adj.sum(axis=1, keepdims=True), 1.0, None)  # src degree
    in_deg = jnp.clip(adj.sum(axis=2, keepdims=True), 1.0, None)   # dst degree
    return adj * jax.lax.rsqrt(in_deg) * jax.lax.rsqrt(out_deg)


def rgcn_forward(a_norms, x, params, *, mxu_dtype=jnp.bfloat16,
                 tile_m=512, tile_k=512):
    """Two-layer forward. a_norms = (block0, block1) normalized adjacencies,
    each (R, N, N).  mxu_dtype is the dtype of the MXU operands (adjacency, X,
    W, XW); accumulation, bias, ReLU and the inter-layer h stay in f32.
    mxu_dtype=None keeps f32 operands (exact path)."""
    a1, a2 = a_norms
    num_rel, n, _ = a1.shape
    f_in = x.shape[1]
    hid = params["w1"].shape[2]
    f_out = params["w2"].shape[2]
    compute_dtype = jnp.float32 if mxu_dtype is None else mxu_dtype

    n_p = _round_up(n, 128)
    f_in_p = _round_up(f_in, 128)
    hid_p = _round_up(hid, 128)
    f_out_p = _round_up(f_out, 128)
    vmem_limit = _vmem_limit_bytes()

    def pad_adj(a):
        # Built directly in the (R, N_dst, N_src) kernel layout.
        # TODO(synk): cache padded adjacency across calls for static graphs.
        return jnp.zeros((num_rel, n_p, n_p), compute_dtype
                         ).at[:, :n, :n].set(a.astype(compute_dtype))

    a1_p, a2_p = pad_adj(a1), pad_adj(a2)
    x_p = jnp.zeros((n_p, f_in_p), compute_dtype
                    ).at[:n, :f_in].set(x.astype(compute_dtype))
    w1_p = jnp.zeros((num_rel, f_in_p, hid_p), compute_dtype
                     ).at[:, :f_in, :hid].set(params["w1"].astype(compute_dtype))
    w2_p = jnp.zeros((num_rel, hid_p, f_out_p), compute_dtype
                     ).at[:, :hid, :f_out].set(params["w2"].astype(compute_dtype))
    b1_p = jnp.zeros((num_rel, 1, hid_p), jnp.float32
                     ).at[:, 0, :hid].set(params["b1"].astype(jnp.float32))
    b2_p = jnp.zeros((num_rel, 1, f_out_p), jnp.float32
                     ).at[:, 0, :f_out].set(params["b2"].astype(jnp.float32))

    # Layer 1: hoisted XW slab, then sum_r ReLU(A_r @ XW_r + b_r).
    xw1 = precompute_xw(x_p, w1_p, vmem_limit=vmem_limit)
    h = rgcn_layer(a1_p, xw1, b1_p, apply_relu=True,
                   tile_m=tile_m, tile_k=tile_k, vmem_limit=vmem_limit)

    # Layer 2 (h kept f32 between layers; only MXU operands are quantized).
    xw2 = precompute_xw(h.astype(compute_dtype), w2_p, vmem_limit=vmem_limit)
    out = rgcn_layer(a2_p, xw2, b2_p, apply_relu=True,
                     tile_m=tile_m, tile_k=tile_k, vmem_limit=vmem_limit)

    return out[:n, :f_out].astype(x.dtype)


def rgcn_reference(a_norms, x, params):
    """Pure-JAX reference (DGL semantics: per-relation bias+ReLU, hetero sum)."""
    def layer(a, xin, w, b):
        h_r = jnp.einsum("rds,sf,rfo->rdo", a, xin, w,
                         precision=jax.lax.Precision.HIGHEST) + b[:, None, :]
        return jnp.maximum(h_r, 0.0).sum(axis=0)

    h = layer(a_norms[0], x, params["w1"], params["b1"])
    return layer(a_norms[1], h, params["w2"], params["b2"])


# -------------------------------- main --------------------------------------- #
if __name__ == "__main__":
    # small, deterministic synthetic problem
    N = 16          # number of nodes
    R = 3           # number of relations (rel_names)
    in_feats = 8
    hid_feats = 32
    out_feats = 16

    key = jax.random.PRNGKey(0)
    k_a1, k_a2, k_x, k_w1, k_b1, k_w2, k_b2 = jax.random.split(key, 7)

    # per-relation 0/1 adjacency for each layer's block, then 'both' norm
    adj1 = jax.random.bernoulli(k_a1, p=0.3, shape=(R, N, N)).astype(jnp.float32)
    adj2 = jax.random.bernoulli(k_a2, p=0.3, shape=(R, N, N)).astype(jnp.float32)
    a_norms = (normalize_adjacency(adj1), normalize_adjacency(adj2))

    x = jax.random.normal(k_x, (N, in_feats), dtype=jnp.float32)

    def glorot(k, shape):
        fan_in, fan_out = shape[-2], shape[-1]
        scale = jnp.sqrt(6.0 / (fan_in + fan_out))
        return jax.random.uniform(k, shape, jnp.float32, -scale, scale)

    params = {
        "w1": glorot(k_w1, (R, in_feats, hid_feats)),
        "b1": 0.01 * jax.random.normal(k_b1, (R, hid_feats), jnp.float32),
        "w2": glorot(k_w2, (R, hid_feats, out_feats)),
        "b2": 0.01 * jax.random.normal(k_b2, (R, out_feats), jnp.float32),
    }

    ref = jax.block_until_ready(rgcn_reference(a_norms, x, params))

    # Exact path: f32 MXU operands.
    out_f32 = jax.block_until_ready(rgcn_forward(a_norms, x, params,
                                                 mxu_dtype=None))
    np.testing.assert_allclose(np.asarray(out_f32), np.asarray(ref),
                               rtol=2e-4, atol=2e-4)

    # Throughput path: bf16 MXU operands, f32 accumulation / f32 inter-layer h.
    out_bf16 = jax.block_until_ready(
        rgcn_forward(a_norms, x, params, mxu_dtype=jnp.bfloat16))
    np.testing.assert_allclose(np.asarray(out_bf16), np.asarray(ref),
                               rtol=5e-2, atol=5e-2)

    print("KERNEL_OK")
</pallas_src>

<mosaic_0001>
module attributes {stable_mosaic.version = 11 : i64} {
  func.func @_xw_kernel(%arg0: i32, %arg1: i32, %arg2: memref<128x128xf32, #tpu.memory_space<vmem>>, %arg3: memref<1x128x128xf32, #tpu.memory_space<vmem>>, %arg4: memref<1x128x128xf32, #tpu.memory_space<vmem>>) attributes {dimension_semantics = [#tpu.dimension_semantics<parallel>, #tpu.dimension_semantics<parallel>], iteration_bounds = array<i64: 3, 1>, scalar_prefetch = 0 : i64, scratch_operands = 0 : i64, tpu.core_type = #tpu.core_type<tc>, window_params = [{transform_indices = @transform_0, window_bounds = array<i64: 128, 128>}, {transform_indices = @transform_1, window_bounds = array<i64: 1, 128, 128>}, {transform_indices = @transform_2, window_bounds = array<i64: 1, 128, 128>}]} {
    %c0 = arith.constant 0 : index
    %c0_0 = arith.constant 0 : index
    %0 = vector.load %arg2[%c0, %c0_0] : memref<128x128xf32, #tpu.memory_space<vmem>>, vector<128x128xf32>
    %c0_1 = arith.constant 0 : index
    %c0_2 = arith.constant 0 : index
    %c0_3 = arith.constant 0 : index
    %1 = vector.load %arg3[%c0_1, %c0_2, %c0_3] : memref<1x128x128xf32, #tpu.memory_space<vmem>>, vector<1x128x128xf32>
    %2 = vector.shape_cast %1 : vector<1x128x128xf32> to vector<128x128xf32>
    %cst = arith.constant dense<0.000000e+00> : vector<128x128xf32>
    %3 = tpu.matmul %0, %2, %cst {dimension_numbers = #tpu.dot_dimension_numbers<[1], [0], [0], [1], [0, 0, 1, 1], [], []>} : vector<128x128xf32>, vector<128x128xf32>, vector<128x128xf32> -> vector<128x128xf32>
    %c0_4 = arith.constant 0 : index
    %c0_5 = arith.constant 0 : index
    %c0_6 = arith.constant 0 : index
    %4 = vector.load %arg4[%c0_4, %c0_5, %c0_6] : memref<1x128x128xf32, #tpu.memory_space<vmem>>, vector<1x128x128xf32>
    %5 = vector.shape_cast %4 : vector<1x128x128xf32> to vector<128x128xf32>
    %6 = vector.shape_cast %3 : vector<128x128xf32> to vector<1x128x128xf32>
    tpu.vector_store %arg4[%c0_4, %c0_5, %c0_6], %6 {strides = array<i32>} : memref<1x128x128xf32, #tpu.memory_space<vmem>>, vector<1x128x128xf32>,
    return
  }
  func.func @transform_0(%arg0: i32, %arg1: i32) -> (i32, i32) {
    %c0_i32 = arith.constant 0 : i32
    %c0_i32_0 = arith.constant 0 : i32
    return %arg1, %c0_i32 : i32, i32
  }
  func.func @transform_1(%arg0: i32, %arg1: i32) -> (i32, i32, i32) {
    %c0_i32 = arith.constant 0 : i32
    %c0_i32_0 = arith.constant 0 : i32
    %c0_i32_1 = arith.constant 0 : i32
    return %arg0, %c0_i32, %c0_i32_0 : i32, i32, i32
  }
  func.func @transform_2(%arg0: i32, %arg1: i32) -> (i32, i32, i32) {
    %c0_i32 = arith.constant 0 : i32
    %c0_i32_0 = arith.constant 0 : i32
    return %arg0, %arg1, %c0_i32 : i32, i32, i32
  }
}

</mosaic_0001>

<llo_original>
// kernel: tpu_custom_call.1
$region0: #{tpu_custom_call.1}
  #allocation0 [shape = 'u32[]', space=smem, size = 0x4, offset = 0x4, fixed_abs, tag = 'smem constant byte address 0x4 - core index']
  #allocation1 [shape = 'u32[72,128]{1,0:T(1,128)}', space=vmem, size = 0x9000, scoped, tag = 'internal scratch']
  %s0 = inlined_call_operand.hbm [shape: f32[128,128], index: 0, kind: input, shape index: {}]
  %s1 = inlined_call_operand.hbm [shape: f32[3,128,128], index: 1, kind: input, shape index: {}]
  %s2 = inlined_call_operand.hbm [shape: f32[3,128,128], index: 2, kind: output, shape index: {}]
  %s3 = sld [smem:[#allocation0]]
  $region49: #{tpu_custom_call.1} parent=0
    _
  %s5 = ssub.s32 1, %s3
  %s6 = scalar_select 0, %s5, %s3
  $region1: #{tpu_custom_call.1} parent=0
    #allocation2 [shape = 'u8[65536]{0}', space=vmem, size = 0x10000, scoped, tag = 'input window, operand 0, single buffered']
    #allocation3 [shape = 's32[2]{0}', space=sflag, size = 0x8, scoped, tag = 'scoped memory for tpu_custom_call.1']
    #allocation4 [shape = 's32[2]{0}', space=sflag, size = 0x8, scoped, tag = 'scoped memory for tpu_custom_call.1']
    #allocation5 [shape = 'u8[131072]{0}', space=vmem, size = 0x20000, scoped, tag = 'input window, operand 1']
    #allocation6 [shape = 's32[2]{0}', space=sflag, size = 0x8, scoped, tag = 'scoped memory for tpu_custom_call.1']
    #allocation7 [shape = 'u8[131072]{0}', space=vmem, size = 0x20000, scoped, tag = 'output window, operand 0']
    %7 = vsyncpa [#allocation3], 0
    %8 = vsyncpa [#allocation6], 0
    %s9 = scalar_lea.sflag [#allocation6], 1
    %10 = vsyncpa %s9, 0
    %11 = vsyncpa [#allocation4], 0
    %s12 = scalar_lea.sflag [#allocation4], 1
    %13 = vsyncpa %s12, 0
    loop: start=0, step=1, limit=5
    $region2: #{tpu_custom_call.1} parent=1 // loop_pre_header
      _
    $region3: #{tpu_custom_call.1} parent=1 // loop_header
      %s15 = sphi 0, %s19
      %p16 = scmp.ge.s32.totalorder %s15, 5
      %s22 = sphi 0, %s34
      %s23 = sphi 0, %s30
      %s24 = sphi 0, %s22
      %s25 = sphi 0, %s23
      %s26 = sphi 0, %s24
      %s27 = sphi 0, %s25
      %s37 = sphi 0, %s39
      %s40 = sphi 0, %s37
      %s41 = sphi 0, %s40
      %s57 = sphi 0, %s41
      %s63 = sphi 0, %s65
      %s66 = sphi 0, %s63
      %s67 = sphi 0, %s66
      %s83 = sphi 0, %s67
      %s91 = sphi 0, %s93
      %s94 = sphi 0, %s91
      %s95 = sphi 0, %s94
      %s111 = sphi 0, %s95
    $region4: #{tpu_custom_call.1} parent=1 // loop_header_branch
      %18 = sbr.rel (%p16) target = $region8
    $region5: #{tpu_custom_call.1} parent=1 // loop_body
      %s20 = ssub.s32 %s15, 1
      %s21 = ssub.s32 %s15, 2
      %s28 = sadd.s32 1, %s23
      %p29 = scmp.ge.s32.totalorder %s28, 1
      %s30 = scalar_select %p29, 0, %s28
      %s31 = sadd.s32 1, %s22
      %s32 = scalar_select %p29, %s31, %s22
      %p33 = scmp.ge.s32.totalorder %s32, 3
      %s34 = scalar_select %p33, 0, %s32
      %s35 = ssub.s32 %s23, %s30
      %p36 = scmp.eq.s32.totalorder %s35, 0
      %s38 = sadd.s32 %s37, 1
      %s39 = scalar_select %p36, %s37, %s38
      %p42 = pneg %p36
      %p43 = scmp.eq.s32.totalorder %s15, 2
      %p44 = por %p42, %p43
      %p45 = scmp.ne.s32.totalorder %s37, %s40
      %p46 = scmp.eq.s32.totalorder %s15, 0
      %p47 = por %p45, %p46
      %p48 = scmp.ne.s32.totalorder %s37, %s40
      %p49 = scmp.eq.s32.totalorder %s20, 2
      %p50 = por %p48, %p49
      %p51 = scmp.ne.s32.totalorder %s40, %s41
      %p52 = scmp.eq.s32.totalorder %s20, 0
      %p53 = por %p51, %p52
      %p54 = scmp.ne.s32.totalorder %s40, %s41
      %p55 = scmp.eq.s32.totalorder %s21, 2
      %p56 = por %p54, %p55
      %p58 = scmp.ne.s32.totalorder %s41, %s57
      %p59 = scmp.eq.s32.totalorder %s21, 0
      %p60 = por %p58, %p59
      %s61 = ssub.s32 %s22, %s34
      %p62 = scmp.eq.s32.totalorder %s61, 0
      %s64 = sadd.s32 %s63, 1
      %s65 = scalar_select %p62, %s63, %s64
      %p68 = pneg %p62
      %p69 = scmp.eq.s32.totalorder %s15, 2
      %p70 = por %p68, %p69
      %p71 = scmp.ne.s32.totalorder %s63, %s66
      %p72 = scmp.eq.s32.totalorder %s15, 0
      %p73 = por %p71, %p72
      %p74 = scmp.ne.s32.totalorder %s63, %s66
      %p75 = scmp.eq.s32.totalorder %s20, 2
      %p76 = por %p74, %p75
      %p77 = scmp.ne.s32.totalorder %s66, %s67
      %p78 = scmp.eq.s32.totalorder %s20, 0
      %p79 = por %p77, %p78
      %p80 = scmp.ne.s32.totalorder %s66, %s67
      %p81 = scmp.eq.s32.totalorder %s21, 2
      %p82 = por %p80, %p81
      %p84 = scmp.ne.s32.totalorder %s67, %s83
      %p85 = scmp.eq.s32.totalorder %s21, 0
      %p86 = por %p84, %p85
      %s87 = ssub.s32 %s22, %s34
      %s88 = ssub.s32 %s23, %s30
      %s89 = sor.u32 %s87, %s88
      %p90 = scmp.eq.s32.totalorder %s89, 0
      %s92 = sadd.s32 %s91, 1
      %s93 = scalar_select %p90, %s91, %s92
      %p96 = pneg %p90
      %p97 = scmp.eq.s32.totalorder %s15, 2
      %p98 = por %p96, %p97
      %p99 = scmp.ne.s32.totalorder %s91, %s94
      %p100 = scmp.eq.s32.totalorder %s15, 0
      %p101 = por %p99, %p100
      %p102 = scmp.ne.s32.totalorder %s91, %s94
      %p103 = scmp.eq.s32.totalorder %s20, 2
      %p104 = por %p102, %p103
      %p105 = scmp.ne.s32.totalorder %s94, %s95
      %p106 = scmp.eq.s32.totalorder %s20, 0
      %p107 = por %p105, %p106
      %p108 = scmp.ne.s32.totalorder %s94, %s95
      %p109 = scmp.eq.s32.totalorder %s21, 2
      %p110 = por %p108, %p109
      %p112 = scmp.ne.s32.totalorder %s95, %s111
      %p113 = scmp.eq.s32.totalorder %s21, 0
      %p114 = por %p112, %p113
      %p115 = scmp.le.s32.totalorder 1, %s15
      %p116 = scmp.lt.s32.totalorder %s15, 4
      %p117 = pnand %p115, %p116
      %p118 = pneg %p117
      // Predicated region
      $region9: #{tpu_custom_call.1} parent=5 // pred_check
        _
      $region10: #{tpu_custom_call.1} parent=5 // pred_check_branch
        %120 = sbr.rel (%p117) target = $region12
      $region11: #{tpu_custom_call.1} parent=5 // pred_region
        %s121 = ssub.s32 %s15, 1
        // Predicated region
        $region13: #{tpu_custom_call.1} parent=11 // pred_check
          %p122 = pneg %p53
        $region14: #{tpu_custom_call.1} parent=11 // pred_check_branch
          %124 = sbr.rel (%p122) target = $region16
        $region15: #{tpu_custom_call.1} parent=11 // pred_region
          %s125 = smul.u32 16, %s25
          %127 = vsyncadd [#allocation3], 0
          %s128 = smul.addr %s125, 8
          %s129 = scalar_lea.hbm %s0, %s128
          %s130 = sshll.u32 %s129, 4
          %s131 = int_to_ptr.hbm [resolvable:$true] %s130
          %s132 = sshll.u32 [#allocation2], 4
          %s133 = int_to_ptr.vmem [resolvable:$true] %s132
          %138 = dma.hbm_to_vmem [thread:$0]  %s131, 2048, %s133, [#allocation3], 128, 128, 8
        $region16: #{tpu_custom_call.1} parent=11 // pred_fallthru
          _
      $region12: #{tpu_custom_call.1} parent=5 // pred_fallthru
        _
      %p139 = scmp.lt.s32.totalorder %s15, 3
      // Predicated region
      $region17: #{tpu_custom_call.1} parent=5 // pred_check
        %p140 = pneg %p139
      $region18: #{tpu_custom_call.1} parent=5 // pred_check_branch
        %142 = sbr.rel (%p140) target = $region20
      $region19: #{tpu_custom_call.1} parent=5 // pred_region
        // Predicated region
        $region21: #{tpu_custom_call.1} parent=19 // pred_check
          %p143 = pneg %p73
        $region22: #{tpu_custom_call.1} parent=19 // pred_check_branch
          %145 = sbr.rel (%p143) target = $region24
        $region23: #{tpu_custom_call.1} parent=19 // pred_region
          %s146 = sand.u32 %s63, 1
          %s147 = scalar_lea.sflag [#allocation6], %s146
          %s148 = sand.u32 %s63, 1
          %s149 = smul.addr %s148, 128
          %s150 = scalar_lea.vmem [#allocation5], %s149
          %152 = vsyncadd %s147, 0
          %s153 = smul.addr %s22, 16
          %s154 = smul.addr %s153, 8
          %s155 = scalar_lea.hbm %s1, %s154
          %s156 = sshll.u32 %s155, 4
          %s157 = int_to_ptr.hbm [resolvable:$true] %s156
          %s158 = sshll.u32 %s150, 4
          %s159 = int_to_ptr.vmem [resolvable:$true] %s158
          %164 = dma.hbm_to_vmem [thread:$0]  %s157, 2048, %s159, %s147, 128, 128, 8
        $region24: #{tpu_custom_call.1} parent=19 // pred_fallthru
          _
      $region20: #{tpu_custom_call.1} parent=5 // pred_fallthru
        _
      %p165 = scmp.le.s32.totalorder 1, %s15
      %p166 = scmp.lt.s32.totalorder %s15, 4
      %p167 = pnand %p165, %p166
      %p168 = pneg %p167
      // Predicated region
      $region25: #{tpu_custom_call.1} parent=5 // pred_check
        _
      $region26: #{tpu_custom_call.1} parent=5 // pred_check_branch
        %170 = sbr.rel (%p167) target = $region28
      $region27: #{tpu_custom_call.1} parent=5 // pred_region
        %s171 = ssub.s32 %s15, 1
        // Predicated region
        $region29: #{tpu_custom_call.1} parent=27 // pred_check
          %p172 = pneg %p53
        $region30: #{tpu_custom_call.1} parent=27 // pred_check_branch
          %174 = sbr.rel (%p172) target = $region32
        $region31: #{tpu_custom_call.1} parent=27 // pred_region
          %176 = dma.done [#allocation3], 2048
        $region32: #{tpu_custom_call.1} parent=27 // pred_fallthru
          _
        %s177 = sand.u32 %s66, 1
        %s178 = scalar_lea.sflag [#allocation6], %s177
        %s179 = sand.u32 %s66, 1
        %s180 = smul.addr %s179, 128
        %s181 = scalar_lea.vmem [#allocation5], %s180
        // Predicated region
        $region33: #{tpu_custom_call.1} parent=27 // pred_check
          %p182 = pneg %p79
        $region34: #{tpu_custom_call.1} parent=27 // pred_check_branch
          %184 = sbr.rel (%p182) target = $region36
        $region35: #{tpu_custom_call.1} parent=27 // pred_region
          %186 = dma.done %s178, 2048
        $region36: #{tpu_custom_call.1} parent=27 // pred_fallthru
          _
        %p187 = pneg %p53
        %p188 = pneg %p50
        %s189 = sand.u32 %s66, 1
        %s190 = scalar_lea.sflag [#allocation6], %s189
        %s191 = sand.u32 %s66, 1
        %s192 = smul.addr %s191, 128
        %s193 = scalar_lea.vmem [#allocation5], %s192
        %p194 = pneg %p79
        %p195 = pneg %p76
        %p196 = pneg %p107
        %p197 = pneg %p104
        %s198 = sand.u32 %s94, 1
        %s199 = scalar_lea.sflag [#allocation4], %s198
        %s200 = sand.u32 %s94, 1
        %s201 = smul.addr %s200, 128
        %s202 = scalar_lea.vmem [#allocation7], %s201
        %s203 = smul.u32 16, %s25
        %s204 = smul.u32 16, %s25
        %v205 = vld [vmem:[#allocation2] sm:$0xff]
        %v206 = vld [vmem:[#allocation2 + $0x8] sm:$0xff]
        %v207 = vld [vmem:[#allocation2 + $0x10] sm:$0xff]
        %v208 = vld [vmem:[#allocation2 + $0x18] sm:$0xff]
        %v209 = vld [vmem:[#allocation2 + $0x20] sm:$0xff]
        %v210 = vld [vmem:[#allocation2 + $0x28] sm:$0xff]
        %v211 = vld [vmem:[#allocation2 + $0x30] sm:$0xff]
        %v212 = vld [vmem:[#allocation2 + $0x38] sm:$0xff]
        %v213 = vld [vmem:[#allocation2 + $0x40] sm:$0xff]
        %v214 = vld [vmem:[#allocation2 + $0x48] sm:$0xff]
        %v215 = vld [vmem:[#allocation2 + $0x50] sm:$0xff]
        %v216 = vld [vmem:[#allocation2 + $0x58] sm:$0xff]
        %v217 = vld [vmem:[#allocation2 + $0x60] sm:$0xff]
        %v218 = vld [vmem:[#allocation2 + $0x68] sm:$0xff]
        %v219 = vld [vmem:[#allocation2 + $0x70] sm:$0xff]
        %v220 = vld [vmem:[#allocation2 + $0x78] sm:$0xff]
        %v221 = vld [vmem:[%s181] sm:$0xff]
        %v222 = vld [vmem:[%s181 + $0x8] sm:$0xff]
        %v223 = vld [vmem:[%s181 + $0x10] sm:$0xff]
        %v224 = vld [vmem:[%s181 + $0x18] sm:$0xff]
        %v225 = vld [vmem:[%s181 + $0x20] sm:$0xff]
        %v226 = vld [vmem:[%s181 + $0x28] sm:$0xff]
        %v227 = vld [vmem:[%s181 + $0x30] sm:$0xff]
        %v228 = vld [vmem:[%s181 + $0x38] sm:$0xff]
        %v229 = vld [vmem:[%s181 + $0x40] sm:$0xff]
        %v230 = vld [vmem:[%s181 + $0x48] sm:$0xff]
        %v231 = vld [vmem:[%s181 + $0x50] sm:$0xff]
        %v232 = vld [vmem:[%s181 + $0x58] sm:$0xff]
        %v233 = vld [vmem:[%s181 + $0x60] sm:$0xff]
        %v234 = vld [vmem:[%s181 + $0x68] sm:$0xff]
        %v235 = vld [vmem:[%s181 + $0x70] sm:$0xff]
        %v236 = vld [vmem:[%s181 + $0x78] sm:$0xff]
        %237 = vmatpush.msra.mxu0 %v236
        %238 = vmatpush.msra.mxu0 %v235
        %239 = vmatpush.msra.mxu0 %v234
        %240 = vmatpush.msra.mxu0 %v233
        %241 = vmatpush.msra.mxu0 %v232
        %242 = vmatpush.msra.mxu0 %v231
        %243 = vmatpush.msra.mxu0 %v230
        %244 = vmatpush.msra.mxu0 %v229
        %245 = vmatpush.msra.mxu0 %v228
        %246 = vmatpush.msra.mxu0 %v227
        %247 = vmatpush.msra.mxu0 %v226
        %248 = vmatpush.msra.mxu0 %v225
        %249 = vmatpush.msra.mxu0 %v224
        %250 = vmatpush.msra.mxu0 %v223
        %251 = vmatpush.msra.mxu0 %v222
        %252 = vmatpush.msra.mxu0 %v221
        %253 = vmatmul.f32.gmra.mxu0 %v205
        %v254 = vpop.f32.mrf.mxu0
        %v255 = vadd.f32 0.0, %v254
        %256 = vmatmul.f32.gmra.mxu0 %v206
        %v257 = vpop.f32.mrf.mxu0
        %v258 = vadd.f32 0.0, %v257
        %259 = vmatmul.f32.gmra.mxu0 %v207
        %v260 = vpop.f32.mrf.mxu0
        %v261 = vadd.f32 0.0, %v260
        %262 = vmatmul.f32.gmra.mxu0 %v208
        %v263 = vpop.f32.mrf.mxu0
        %v264 = vadd.f32 0.0, %v263
        %265 = vmatmul.f32.gmra.mxu0 %v209
        %v266 = vpop.f32.mrf.mxu0
        %v267 = vadd.f32 0.0, %v266
        %268 = vmatmul.f32.gmra.mxu0 %v210
        %v269 = vpop.f32.mrf.mxu0
        %v270 = vadd.f32 0.0, %v269
        %271 = vmatmul.f32.gmra.mxu0 %v211
        %v272 = vpop.f32.mrf.mxu0
        %v273 = vadd.f32 0.0, %v272
        %274 = vmatmul.f32.gmra.mxu0 %v212
        %v275 = vpop.f32.mrf.mxu0
        %v276 = vadd.f32 0.0, %v275
        %277 = vmatmul.f32.gmra.mxu0 %v213
        %v278 = vpop.f32.mrf.mxu0
        %v279 = vadd.f32 0.0, %v278
        %280 = vmatmul.f32.gmra.mxu0 %v214
        %v281 = vpop.f32.mrf.mxu0
        %v282 = vadd.f32 0.0, %v281
        %283 = vmatmul.f32.gmra.mxu0 %v215
        %v284 = vpop.f32.mrf.mxu0
        %v285 = vadd.f32 0.0, %v284
        %286 = vmatmul.f32.gmra.mxu0 %v216
        %v287 = vpop.f32.mrf.mxu0
        %v288 = vadd.f32 0.0, %v287
        %289 = vmatmul.f32.gmra.mxu0 %v217
        %v290 = vpop.f32.mrf.mxu0
        %v291 = vadd.f32 0.0, %v290
        %292 = vmatmul.f32.gmra.mxu0 %v218
        %v293 = vpop.f32.mrf.mxu0
        %v294 = vadd.f32 0.0, %v293
        %295 = vmatmul.f32.gmra.mxu0 %v219
        %v296 = vpop.f32.mrf.mxu0
        %v297 = vadd.f32 0.0, %v296
        %298 = vmatmul.f32.gmra.mxu0 %v220
        %v299 = vpop.f32.mrf.mxu0
        %v300 = vadd.f32 0.0, %v299
        %301 = vdwg.mxu0
        %302 = vst [vmem:[%s202] sm:$0xff] %v255
        %303 = vst [vmem:[%s202 + $0x8] sm:$0xff] %v258
        %304 = vst [vmem:[%s202 + $0x10] sm:$0xff] %v261
        %305 = vst [vmem:[%s202 + $0x18] sm:$0xff] %v264
        %306 = vst [vmem:[%s202 + $0x20] sm:$0xff] %v267
        %307 = vst [vmem:[%s202 + $0x28] sm:$0xff] %v270
        %308 = vst [vmem:[%s202 + $0x30] sm:$0xff] %v273
        %309 = vst [vmem:[%s202 + $0x38] sm:$0xff] %v276
        %310 = vst [vmem:[%s202 + $0x40] sm:$0xff] %v279
        %311 = vst [vmem:[%s202 + $0x48] sm:$0xff] %v282
        %312 = vst [vmem:[%s202 + $0x50] sm:$0xff] %v285
        %313 = vst [vmem:[%s202 + $0x58] sm:$0xff] %v288
        %314 = vst [vmem:[%s202 + $0x60] sm:$0xff] %v291
        %315 = vst [vmem:[%s202 + $0x68] sm:$0xff] %v294
        %316 = vst [vmem:[%s202 + $0x70] sm:$0xff] %v297
        %317 = vst [vmem:[%s202 + $0x78] sm:$0xff] %v300
        %s318 = sand.u32 %s94, 1
        %s319 = scalar_lea.sflag [#allocation4], %s318
        %s320 = sand.u32 %s94, 1
        %s321 = smul.addr %s320, 128
        %s322 = scalar_lea.vmem [#allocation7], %s321
        // Predicated region
        $region37: #{tpu_custom_call.1} parent=27 // pred_check
          %p323 = pneg %p104
        $region38: #{tpu_custom_call.1} parent=27 // pred_check_branch
          %325 = sbr.rel (%p323) target = $region40
        $region39: #{tpu_custom_call.1} parent=27 // pred_region
          %s326 = smul.u32 16, %s25
          %328 = vsyncadd %s319, 0
          %s329 = smul.addr %s24, 16
          %s330 = sadd.s32 %s326, %s329
          %s331 = smul.addr %s330, 8
          %s332 = scalar_lea.hbm %s2, %s331
          %s333 = sshll.u32 %s322, 4
          %s334 = int_to_ptr.vmem [resolvable:$true] %s333
          %s335 = sshll.u32 %s332, 4
          %s336 = int_to_ptr.hbm [resolvable:$true] %s335
          %341 = dma.vmem_to_hbm [thread:$0]  %s334, 2048, %s336, %s319, 128, 128, 8
        $region40: #{tpu_custom_call.1} parent=27 // pred_fallthru
          _
      $region28: #{tpu_custom_call.1} parent=5 // pred_fallthru
        _
      %p342 = scmp.le.s32.totalorder 2, %s15
      // Predicated region
      $region41: #{tpu_custom_call.1} parent=5 // pred_check
        %p343 = pneg %p342
      $region42: #{tpu_custom_call.1} parent=5 // pred_check_branch
        %345 = sbr.rel (%p343) target = $region44
      $region43: #{tpu_custom_call.1} parent=5 // pred_region
        %s346 = ssub.s32 %s15, 2
        // Predicated region
        $region45: #{tpu_custom_call.1} parent=43 // pred_check
          %p347 = pneg %p110
        $region46: #{tpu_custom_call.1} parent=43 // pred_check_branch
          %349 = sbr.rel (%p347) target = $region48
        $region47: #{tpu_custom_call.1} parent=43 // pred_region
          %s350 = sand.u32 %s95, 1
          %s351 = scalar_lea.sflag [#allocation4], %s350
          %s352 = sand.u32 %s95, 1
          %s353 = smul.addr %s352, 128
          %s354 = scalar_lea.vmem [#allocation7], %s353
          %356 = dma.done %s351, 2048
        $region48: #{tpu_custom_call.1} parent=43 // pred_fallthru
          _
      $region44: #{tpu_custom_call.1} parent=5 // pred_fallthru
        _
    $region6: #{tpu_custom_call.1} parent=1 // loop_footer
      %s19 = sadd.s32 1, %s15
    $region7: #{tpu_custom_call.1} parent=1 // loop_footer_branch
      %14 = sbr.rel target = $region3
    $region8: #{tpu_custom_call.1} parent=1 // loop_exit
      _
    %357 = vsyncpa [#allocation3], 1
    %s358 = scalar_lea.sflag [#allocation3], 1
    %359 = vsyncpa %s358, 1
    %360 = vsyncpa [#allocation6], 1
    %s361 = scalar_lea.sflag [#allocation6], 1
    %362 = vsyncpa %s361, 1
    %363 = vsyncpa [#allocation4], 1
    %s364 = scalar_lea.sflag [#allocation4], 1
    %365 = vsyncpa %s364, 1

</llo_original>
